<compile_context>
chip_gen: v5e
topology: v5e:2x2
jax: 0.10.0
libtpu: 0.0.40
codegen_flags: <defaults>
</compile_context>

<pallas_src>
import functools

import jax
import jax.numpy as jnp
from jax.experimental import pallas as pl
from jax.experimental.pallas import tpu as pltpu


def _round_up(x: int, m: int) -> int:
    return ((x + m - 1) // m) * m


def _pick_seq_tile(seq_len: int, cap: int):
    """Balanced, sublane-aligned (multiple-of-8) sequence tile and tile count."""
    cap = max(8, (cap // 8) * 8)
    n_st = -(-seq_len // cap)                # number of sequence tiles
    ts = _round_up(-(-seq_len // n_st), 8)   # balanced tile size (<= cap)
    return ts, n_st


def _read_unit_kernel(ts, n_st, seq_len, d_pad, needs_mask,
                      story_ref, pm_ref, v_ref,
                      wsb_ref, wbt_ref, bs_ref, bb_ref,
                      ri_ref, rv_ref,
                      acc_s, m_s, l_s):
    st = pl.program_id(1)

    @pl.when(st == 0)
    def _init():
        m_s[...] = jnp.full_like(m_s, -jnp.inf)
        l_s[...] = jnp.zeros_like(l_s)
        acc_s[...] = jnp.zeros_like(acc_s)

    story = story_ref[0]                                     # (ts, Dp) bf16/f32

    # project_story fused with the story half of blend: one MXU pass with the
    # same LHS -> (ts, 2*Dp) f32 accumulator. Both halves are Dp columns wide,
    # so the split below is a vreg-aligned lane slice (Dp % 128 == 0).
    fused = jnp.dot(story, wsb_ref[...], preferred_element_type=jnp.float32)
    ps = fused[:, :d_pad] + bs_ref[...]                      # project_story(story)
    blend_story = fused[:, d_pad:]                           # story @ wb_bot

    iihw = pm_ref[0] * ps                                    # projected_memory * ps
    # blend(cat([Iihw, story], -1)) == Iihw @ wb_top + story @ wb_bot + bb
    iihwp = (jnp.dot(iihw.astype(wbt_ref.dtype), wbt_ref[...],
                     preferred_element_type=jnp.float32)
             + blend_story + bb_ref[...])

    # input_control(control * Iihwp) as an elementwise gate + lane reduction.
    # (bc is dropped: softmax over the sequence axis is shift invariant.)
    ra = jnp.sum(iihwp * v_ref[0], axis=-1, keepdims=True)   # (ts, 1) f32
    ra_row = jnp.transpose(ra)                               # (1, ts), lane-dense

    if needs_mask:
        idx = st * ts + jax.lax.broadcasted_iota(jnp.int32, (1, ts), 1)
        ra_row = jnp.where(idx < seq_len, ra_row, -jnp.inf)

    # Stage raw logits in the resident rv block, one lane-dense row per tile.
    rv_ref[0, pl.ds(st, 1), :] = ra_row

    # Online softmax (exact across sequence tiles): running max / sum / acc.
    m_prev = m_s[...]                                        # (1, 1)
    m_new = jnp.maximum(m_prev, jnp.max(ra_row, axis=-1, keepdims=True))
    alpha = jnp.exp(m_prev - m_new)
    p_row = jnp.exp(ra_row - m_new)                          # (1, ts) f32
    l_s[...] = alpha * l_s[...] + jnp.sum(p_row, axis=-1, keepdims=True)
    # Softmax-weighted story sum on the MXU: (1, ts) @ (ts, Dp).
    acc_s[...] = alpha * acc_s[...] + jnp.dot(
        p_row.astype(story.dtype), story, preferred_element_type=jnp.float32)
    m_s[...] = m_new

    @pl.when(st == n_st - 1)
    def _finalize():
        # Runs once per batch element (off the hot path) -> exact reciprocal.
        inv_l = pl.reciprocal(l_s[...], approx=False)        # (1, 1)
        ri_ref[0] = (acc_s[...] * inv_l).astype(ri_ref.dtype)            # (1, Dp)
        logits = rv_ref[0]                                               # (n_st, ts)
        rv_ref[0] = (jnp.exp(logits - m_s[...]) * inv_l).astype(rv_ref.dtype)


def read_unit(memory, control, story, params, *,
              compute_dtype=jnp.bfloat16, max_seq_tile=512):
    """memory: (B, D); control: (B, D); story: (S, B, D); D = 2*hidden.

    Returns (ri, rv) matching ReadUnit.forward: ri (B, D), rv (S, B, 1).
    """
    S, B, D = story.shape
    ws, bs, wm, bm, wb, bb, wc, bc = params
    del bc  # constant logit shift over the seq axis -> no-op under softmax

    # ---- per-batch one-time work, hoisted to XLA (review item) ----
    # project_memory has no sequence axis: one batched matmul at full MXU fill;
    # removes a DxD weight from VMEM and the 1-row matmul bubble at st == 0.
    pm = memory @ wm + bm                      # (B, D)
    v = control * wc.reshape(1, D)             # (B, D), input_control weight folded in

    # ---- weight plumbing: split blend so cat([Iihw, story]) never exists ----
    wb_top, wb_bot = wb[:D, :], wb[D:, :]
    # NOTE: since Iihwp only feeds a scalar logit per (s, b), the whole unit
    # could be collapsed algebraically to `ra = story @ a_b + const_b` with a_b
    # computed per batch on the host; the module's matmul structure is kept
    # in-kernel here per the review.

    # ---- lane-align the feature dim (exact: zero padding) ----
    Dp = _round_up(D, 128)
    pf = Dp - D
    pad_vec = lambda x: jnp.pad(x, ((0, 0), (0, pf)))        # (., D)  -> (., Dp)
    pad_mat = lambda w: jnp.pad(w, ((0, pf), (0, pf)))       # (D, D)  -> (Dp, Dp)

    w_story = jnp.concatenate([pad_mat(ws), pad_mat(wb_bot)], axis=1)  # (Dp, 2Dp)
    wbt_p = pad_mat(wb_top)
    bs_p, bb_p = pad_vec(bs), pad_vec(bb)
    pm_b = pad_vec(pm).reshape(B, 1, Dp)
    v_b = pad_vec(v).reshape(B, 1, Dp)

    # ---- sequence tiling (+ padding with -inf logit masking for ragged S) ----
    ts, n_st = _pick_seq_tile(S, max_seq_tile)
    s_pad = ts * n_st
    needs_mask = s_pad != S

    # Batch-major story so each grid step sees a clean 2D (ts, Dp) tile.
    story_b = jnp.transpose(story, (1, 0, 2))                # (B, S, D)
    story_b = jnp.pad(story_b, ((0, 0), (0, s_pad - S), (0, pf)))

    # bf16 MXU operands (f32 accumulation everywhere); per-batch vectors and
    # biases stay f32 so all post-matmul elementwise math runs in f32.
    story_b = story_b.astype(compute_dtype)
    w_story = w_story.astype(compute_dtype)
    wbt_p = wbt_p.astype(compute_dtype)

    # TODO(synk): for tiny S / tiny D, pack several batch rows per grid step to
    # fill the MXU M dimension (needs per-row pm/v broadcast + per-row softmax).
    grid_spec = pltpu.PrefetchScalarGridSpec(
        num_scalar_prefetch=0,
        grid=(B, n_st),
        in_specs=[
            pl.BlockSpec((1, ts, Dp), lambda b, st: (b, st, 0)),   # story tile
            pl.BlockSpec((1, 1, Dp), lambda b, st: (b, 0, 0)),     # projected memory
            pl.BlockSpec((1, 1, Dp), lambda b, st: (b, 0, 0)),     # control * wc
            pl.BlockSpec((Dp, 2 * Dp), lambda b, st: (0, 0)),      # [ws | wb_bot]
            pl.BlockSpec((Dp, Dp), lambda b, st: (0, 0)),          # wb_top
            pl.BlockSpec((1, Dp), lambda b, st: (0, 0)),           # bs
            pl.BlockSpec((1, Dp), lambda b, st: (0, 0)),           # bb
        ],
        out_specs=(
            pl.BlockSpec((1, 1, Dp), lambda b, st: (b, 0, 0)),     # ri (lane-dense)
            pl.BlockSpec((1, n_st, ts), lambda b, st: (b, 0, 0)),  # rv logits (resident)
        ),
        scratch_shapes=[
            pltpu.VMEM((1, Dp), jnp.float32),   # acc_s: online sum(exp * story)
            pltpu.VMEM((1, 1), jnp.float32),    # m_s  : running max
            pltpu.VMEM((1, 1), jnp.float32),    # l_s  : running sum(exp)
        ],
    )

    ri3, rv3 = pl.pallas_call(
        functools.partial(_read_unit_kernel, ts, n_st, S, Dp, needs_mask),
        out_shape=(jax.ShapeDtypeStruct((B, 1, Dp), jnp.float32),
                   jax.ShapeDtypeStruct((B, n_st, ts), jnp.float32)),
        grid_spec=grid_spec,
        compiler_params=pltpu.CompilerParams(
            # Batch axis splits across TensorCores; the sequence / online
            # softmax axis is a carried reduction.
            dimension_semantics=("parallel", "arbitrary"),
            # <= physical VMEM on v5e/v6e/v7x (64 MiB/TC on v7x); bf16 weights
            # double-buffered are ~12*D^2 bytes (12 MiB at D=1024).
            vmem_limit_bytes=64 * 1024 * 1024,
        ),
    )(story_b, pm_b, v_b, w_story, wbt_p, bs_p, bb_p)

    ri = ri3.reshape(B, Dp)[:, :D]                                   # (B, D)
    rv = jnp.transpose(rv3.reshape(B, s_pad)[:, :S])[:, :, None]     # (S, B, 1)
    return ri, rv


def init_params(key, hidden):
    """Deterministic synthetic weights, PyTorch Linear shapes, pre-transposed."""
    D = 2 * hidden
    ks = jax.random.split(key, 8)
    scale = 0.1
    ws = scale * jax.random.normal(ks[0], (D, D), jnp.float32)       # project_story.W^T
    bs = scale * jax.random.normal(ks[1], (1, D), jnp.float32)
    wm = scale * jax.random.normal(ks[2], (D, D), jnp.float32)       # project_memory.W^T
    bm = scale * jax.random.normal(ks[3], (1, D), jnp.float32)
    wb = scale * jax.random.normal(ks[4], (2 * D, D), jnp.float32)   # blend.W^T
    bb = scale * jax.random.normal(ks[5], (1, D), jnp.float32)
    wc = scale * jax.random.normal(ks[6], (D, 1), jnp.float32)       # input_control.W^T
    bc = scale * jax.random.normal(ks[7], (1, 1), jnp.float32)
    # TODO(synk): `self.attend = nn.Linear(hidden, 1)` is never used in forward; omitted.
    return ws, bs, wm, bm, wb, bb, wc, bc


def read_unit_ref(memory, control, story, params):
    """Pure-JAX reference mirroring the PyTorch forward (f32 end to end)."""
    ws, bs, wm, bm, wb, bb, wc, bc = params
    ps = story @ ws + bs                       # (S,B,D)
    pm = memory @ wm + bm                      # (B,D)
    Iihw = pm[None] * ps
    Iihwp = jnp.concatenate([Iihw, story], -1) @ wb + bb
    ra = (control[None] * Iihwp) @ wc + bc     # (S,B,1)
    rv = jax.nn.softmax(ra, axis=0)
    ri = (rv * story).sum(axis=0)
    return ri, rv


if __name__ == "__main__":
    hidden = 16
    D = 2 * hidden          # story feature dim (2*hidden_size)
    S, B = 8, 2

    key = jax.random.PRNGKey(0)
    k_p, k_m, k_c, k_s, k_m2, k_c2, k_s2 = jax.random.split(key, 7)
    params = init_params(k_p, hidden)

    memory = jax.random.normal(k_m, (B, D), jnp.float32)
    control = jax.random.normal(k_c, (B, D), jnp.float32)
    story = jax.random.normal(k_s, (S, B, D), jnp.float32)
    ri_ref, rv_ref_ = read_unit_ref(memory, control, story, params)

    # 1) Default bf16-MXU path (f32 accumulation) -> bf16-level tolerance.
    ri, rv = jax.block_until_ready(read_unit(memory, control, story, params))
    assert ri.shape == (B, D) and rv.shape == (S, B, 1)
    assert jnp.allclose(ri, ri_ref, atol=3e-2, rtol=3e-2)
    assert jnp.allclose(rv, rv_ref_, atol=3e-2, rtol=3e-2)

    # 2) f32 path of the same kernel -> tight tolerance vs. the reference.
    ri32, rv32 = jax.block_until_ready(
        read_unit(memory, control, story, params, compute_dtype=jnp.float32))
    assert jnp.allclose(ri32, ri_ref, atol=1e-4, rtol=1e-4)
    assert jnp.allclose(rv32, rv_ref_, atol=1e-4, rtol=1e-4)

    # 3) Multi-tile online softmax + ragged-sequence masking path (S=13, ts=8).
    S2 = 13
    memory2 = jax.random.normal(k_m2, (B, D), jnp.float32)
    control2 = jax.random.normal(k_c2, (B, D), jnp.float32)
    story2 = jax.random.normal(k_s2, (S2, B, D), jnp.float32)
    ri2_ref, rv2_ref = read_unit_ref(memory2, control2, story2, params)
    ri2, rv2 = jax.block_until_ready(
        read_unit(memory2, control2, story2, params,
                  compute_dtype=jnp.float32, max_seq_tile=8))
    assert ri2.shape == (B, D) and rv2.shape == (S2, B, 1)
    assert jnp.allclose(ri2, ri2_ref, atol=1e-4, rtol=1e-4)
    assert jnp.allclose(rv2, rv2_ref, atol=1e-4, rtol=1e-4)

    print("KERNEL_OK")
</pallas_src>

<mosaic_0001>
module attributes {stable_mosaic.version = 11 : i64} {
  func.func @_read_unit_kernel(%arg0: i32, %arg1: i32, %arg2: memref<1x8x128xbf16, #tpu.memory_space<vmem>>, %arg3: memref<1x1x128xf32, #tpu.memory_space<vmem>>, %arg4: memref<1x1x128xf32, #tpu.memory_space<vmem>>, %arg5: memref<128x256xbf16, #tpu.memory_space<vmem>>, %arg6: memref<128x128xbf16, #tpu.memory_space<vmem>>, %arg7: memref<1x128xf32, #tpu.memory_space<vmem>>, %arg8: memref<1x128xf32, #tpu.memory_space<vmem>>, %arg9: memref<1x1x128xf32, #tpu.memory_space<vmem>>, %arg10: memref<1x1x8xf32, #tpu.memory_space<vmem>>, %arg11: memref<1x128xf32, #tpu.memory_space<vmem>>, %arg12: memref<1x1xf32, #tpu.memory_space<vmem>>, %arg13: memref<1x1xf32, #tpu.memory_space<vmem>>) attributes {dimension_semantics = [#tpu.dimension_semantics<parallel>, #tpu.dimension_semantics<arbitrary>], iteration_bounds = array<i64: 2, 1>, scalar_prefetch = 0 : i64, scratch_operands = 3 : i64, tpu.core_type = #tpu.core_type<tc>, window_params = [{transform_indices = @transform_0, window_bounds = array<i64: 1, 8, 128>}, {transform_indices = @transform_1, window_bounds = array<i64: 1, 1, 128>}, {transform_indices = @transform_2, window_bounds = array<i64: 1, 1, 128>}, {pipeline_mode = #tpu.pipeline_mode<synchronous>, transform_indices = @transform_3, window_bounds = array<i64: 128, 256>}, {pipeline_mode = #tpu.pipeline_mode<synchronous>, transform_indices = @transform_4, window_bounds = array<i64: 128, 128>}, {pipeline_mode = #tpu.pipeline_mode<synchronous>, transform_indices = @transform_5, window_bounds = array<i64: 1, 128>}, {pipeline_mode = #tpu.pipeline_mode<synchronous>, transform_indices = @transform_6, window_bounds = array<i64: 1, 128>}, {transform_indices = @transform_7, window_bounds = array<i64: 1, 1, 128>}, {transform_indices = @transform_8, window_bounds = array<i64: 1, 1, 8>}]} {
    %c0_i32 = arith.constant 0 : i32
    %0 = arith.cmpi eq, %arg1, %c0_i32 : i32
    %1 = arith.extui %0 : i1 to i32
    %c0_i32_0 = arith.constant 0 : i32
    %2 = arith.cmpi ne, %1, %c0_i32_0 : i32
    scf.if %2 {
      %cst_38 = arith.constant 0xFF800000 : f32
      %60 = vector.broadcast %cst_38 : f32 to vector<1x1xf32>
      %c0_39 = arith.constant 0 : index
      %c0_40 = arith.constant 0 : index
      %61 = vector.load %arg12[%c0_39, %c0_40] : memref<1x1xf32, #tpu.memory_space<vmem>>, vector<1x1xf32>
      tpu.vector_store %arg12[%c0_39, %c0_40], %60 {strides = array<i32>} : memref<1x1xf32, #tpu.memory_space<vmem>>, vector<1x1xf32>,
      %cst_41 = arith.constant 0.000000e+00 : f32
      %62 = vector.broadcast %cst_41 : f32 to vector<1x1xf32>
      %c0_42 = arith.constant 0 : index
      %c0_43 = arith.constant 0 : index
      %63 = vector.load %arg13[%c0_42, %c0_43] : memref<1x1xf32, #tpu.memory_space<vmem>>, vector<1x1xf32>
      tpu.vector_store %arg13[%c0_42, %c0_43], %62 {strides = array<i32>} : memref<1x1xf32, #tpu.memory_space<vmem>>, vector<1x1xf32>,
      %cst_44 = arith.constant 0.000000e+00 : f32
      %64 = vector.broadcast %cst_44 : f32 to vector<1x128xf32>
      %c0_45 = arith.constant 0 : index
      %c0_46 = arith.constant 0 : index
      %65 = vector.load %arg11[%c0_45, %c0_46] : memref<1x128xf32, #tpu.memory_space<vmem>>, vector<1x128xf32>
      tpu.vector_store %arg11[%c0_45, %c0_46], %64 {strides = array<i32>} : memref<1x128xf32, #tpu.memory_space<vmem>>, vector<1x128xf32>,
    } else {
    }
    %c0 = arith.constant 0 : index
    %c0_1 = arith.constant 0 : index
    %c0_2 = arith.constant 0 : index
    %3 = vector.load %arg2[%c0, %c0_1, %c0_2] : memref<1x8x128xbf16, #tpu.memory_space<vmem>>, vector<1x8x128xbf16>
    %4 = vector.shape_cast %3 : vector<1x8x128xbf16> to vector<8x128xbf16>
    %c0_3 = arith.constant 0 : index
    %c0_4 = arith.constant 0 : index
    %5 = vector.load %arg5[%c0_3, %c0_4] : memref<128x256xbf16, #tpu.memory_space<vmem>>, vector<128x256xbf16>
    %cst = arith.constant dense<0.000000e+00> : vector<8x256xf32>
    %6 = tpu.matmul %4, %5, %cst {dimension_numbers = #tpu.dot_dimension_numbers<[1], [0], [0], [1], [0, 0, 1, 1], [], []>} : vector<8x128xbf16>, vector<128x256xbf16>, vector<8x256xf32> -> vector<8x256xf32>
    %7 = vector.extract_strided_slice %6 {offsets = [0, 0], sizes = [8, 128], strides = [1, 1]} : vector<8x256xf32> to vector<8x128xf32>
    %c0_5 = arith.constant 0 : index
    %c0_6 = arith.constant 0 : index
    %8 = vector.load %arg7[%c0_5, %c0_6] : memref<1x128xf32, #tpu.memory_space<vmem>>, vector<1x128xf32>
    %9 = vector.broadcast %8 : vector<1x128xf32> to vector<8x128xf32>
    %10 = arith.addf %7, %9 : vector<8x128xf32>
    %11 = vector.extract_strided_slice %6 {offsets = [0, 128], sizes = [8, 128], strides = [1, 1]} : vector<8x256xf32> to vector<8x128xf32>
    %c0_7 = arith.constant 0 : index
    %c0_8 = arith.constant 0 : index
    %c0_9 = arith.constant 0 : index
    %12 = vector.load %arg3[%c0_7, %c0_8, %c0_9] : memref<1x1x128xf32, #tpu.memory_space<vmem>>, vector<1x1x128xf32>
    %13 = vector.shape_cast %12 : vector<1x1x128xf32> to vector<1x128xf32>
    %14 = vector.broadcast %13 : vector<1x128xf32> to vector<8x128xf32>
    %15 = arith.mulf %14, %10 : vector<8x128xf32>
    %16 = arith.truncf %15 : vector<8x128xf32> to vector<8x128xbf16>
    %c0_10 = arith.constant 0 : index
    %c0_11 = arith.constant 0 : index
    %17 = vector.load %arg6[%c0_10, %c0_11] : memref<128x128xbf16, #tpu.memory_space<vmem>>, vector<128x128xbf16>
    %cst_12 = arith.constant dense<0.000000e+00> : vector<8x128xf32>
    %18 = tpu.matmul %16, %17, %cst_12 {dimension_numbers = #tpu.dot_dimension_numbers<[1], [0], [0], [1], [0, 0, 1, 1], [], []>} : vector<8x128xbf16>, vector<128x128xbf16>, vector<8x128xf32> -> vector<8x128xf32>
    %19 = arith.addf %18, %11 : vector<8x128xf32>
    %c0_13 = arith.constant 0 : index
    %c0_14 = arith.constant 0 : index
    %20 = vector.load %arg8[%c0_13, %c0_14] : memref<1x128xf32, #tpu.memory_space<vmem>>, vector<1x128xf32>
    %21 = vector.broadcast %20 : vector<1x128xf32> to vector<8x128xf32>
    %22 = arith.addf %19, %21 : vector<8x128xf32>
    %c0_15 = arith.constant 0 : index
    %c0_16 = arith.constant 0 : index
    %c0_17 = arith.constant 0 : index
    %23 = vector.load %arg4[%c0_15, %c0_16, %c0_17] : memref<1x1x128xf32, #tpu.memory_space<vmem>>, vector<1x1x128xf32>
    %24 = vector.shape_cast %23 : vector<1x1x128xf32> to vector<1x128xf32>
    %25 = vector.broadcast %24 : vector<1x128xf32> to vector<8x128xf32>
    %26 = arith.mulf %22, %25 : vector<8x128xf32>
    %cst_18 = arith.constant dense<0.000000e+00> : vector<8xf32>
    %27 = vector.multi_reduction <add>, %26, %cst_18 [1] : vector<8x128xf32> to vector<8xf32>
    %28 = vector.shape_cast %27 : vector<8xf32> to vector<8x1xf32>
    %29 = tpu.transpose %28, [1, 0] : vector<8x1xf32> -> vector<1x8xf32>
    %c0_19 = arith.constant 0 : index
    %30 = arith.index_cast %arg1 : i32 to index
    %c0_20 = arith.constant 0 : index
    %31 = vector.load %arg10[%c0_19, %30, %c0_20] : memref<1x1x8xf32, #tpu.memory_space<vmem>>, vector<1x1x8xf32>
    %32 = vector.shape_cast %31 : vector<1x1x8xf32> to vector<1x8xf32>
    %33 = vector.shape_cast %29 : vector<1x8xf32> to vector<1x1x8xf32>
    tpu.vector_store %arg10[%c0_19, %30, %c0_20], %33 {strides = array<i32>} : memref<1x1x8xf32, #tpu.memory_space<vmem>>, vector<1x1x8xf32>,
    %c0_21 = arith.constant 0 : index
    %c0_22 = arith.constant 0 : index
    %34 = vector.load %arg12[%c0_21, %c0_22] : memref<1x1xf32, #tpu.memory_space<vmem>>, vector<1x1xf32>
    %cst_23 = arith.constant dense<0xFF800000> : vector<1xf32>
    %35 = vector.multi_reduction <maximumf>, %29, %cst_23 [1] : vector<1x8xf32> to vector<1xf32>
    %36 = vector.shape_cast %35 : vector<1xf32> to vector<1x1xf32>
    %37 = arith.maximumf %34, %36 : vector<1x1xf32>
    %38 = arith.subf %34, %37 : vector<1x1xf32>
    %39 = math.exp %38 : vector<1x1xf32>
    %40 = vector.broadcast %37 : vector<1x1xf32> to vector<1x8xf32>
    %41 = arith.subf %29, %40 : vector<1x8xf32>
    %42 = math.exp %41 : vector<1x8xf32>
    %c0_24 = arith.constant 0 : index
    %c0_25 = arith.constant 0 : index
    %43 = vector.load %arg13[%c0_24, %c0_25] : memref<1x1xf32, #tpu.memory_space<vmem>>, vector<1x1xf32>
    %44 = arith.mulf %39, %43 : vector<1x1xf32>
    %cst_26 = arith.constant dense<0.000000e+00> : vector<1xf32>
    %45 = vector.multi_reduction <add>, %42, %cst_26 [1] : vector<1x8xf32> to vector<1xf32>
    %46 = vector.shape_cast %45 : vector<1xf32> to vector<1x1xf32>
    %47 = arith.addf %44, %46 : vector<1x1xf32>
    %c0_27 = arith.constant 0 : index
    %c0_28 = arith.constant 0 : index
    %48 = vector.load %arg13[%c0_27, %c0_28] : memref<1x1xf32, #tpu.memory_space<vmem>>, vector<1x1xf32>
    tpu.vector_store %arg13[%c0_27, %c0_28], %47 {strides = array<i32>} : memref<1x1xf32, #tpu.memory_space<vmem>>, vector<1x1xf32>,
    %c0_29 = arith.constant 0 : index
    %c0_30 = arith.constant 0 : index
    %49 = vector.load %arg11[%c0_29, %c0_30] : memref<1x128xf32, #tpu.memory_space<vmem>>, vector<1x128xf32>
    %50 = vector.broadcast %39 : vector<1x1xf32> to vector<1x128xf32>
    %51 = arith.mulf %50, %49 : vector<1x128xf32>
    %52 = arith.truncf %42 : vector<1x8xf32> to vector<1x8xbf16>
    %cst_31 = arith.constant dense<0.000000e+00> : vector<1x128xf32>
    %53 = tpu.matmul %52, %4, %cst_31 {dimension_numbers = #tpu.dot_dimension_numbers<[1], [0], [0], [1], [0, 0, 1, 1], [], []>} : vector<1x8xbf16>, vector<8x128xbf16>, vector<1x128xf32> -> vector<1x128xf32>
    %54 = arith.addf %51, %53 : vector<1x128xf32>
    %c0_32 = arith.constant 0 : index
    %c0_33 = arith.constant 0 : index
    %55 = vector.load %arg11[%c0_32, %c0_33] : memref<1x128xf32, #tpu.memory_space<vmem>>, vector<1x128xf32>
    tpu.vector_store %arg11[%c0_32, %c0_33], %54 {strides = array<i32>} : memref<1x128xf32, #tpu.memory_space<vmem>>, vector<1x128xf32>,
    %c0_34 = arith.constant 0 : index
    %c0_35 = arith.constant 0 : index
    %56 = vector.load %arg12[%c0_34, %c0_35] : memref<1x1xf32, #tpu.memory_space<vmem>>, vector<1x1xf32>
    tpu.vector_store %arg12[%c0_34, %c0_35], %37 {strides = array<i32>} : memref<1x1xf32, #tpu.memory_space<vmem>>, vector<1x1xf32>,
    %c0_i32_36 = arith.constant 0 : i32
    %57 = arith.cmpi eq, %arg1, %c0_i32_36 : i32
    %58 = arith.extui %57 : i1 to i32
    %c0_i32_37 = arith.constant 0 : i32
    %59 = arith.cmpi ne, %58, %c0_i32_37 : i32
    scf.if %59 {
      %c0_38 = arith.constant 0 : index
      %c0_39 = arith.constant 0 : index
      %60 = vector.load %arg13[%c0_38, %c0_39] : memref<1x1xf32, #tpu.memory_space<vmem>>, vector<1x1xf32>
      %61 = tpu.reciprocal %60 : vector<1x1xf32> -> vector<1x1xf32>
      %c0_40 = arith.constant 0 : index
      %c0_41 = arith.constant 0 : index
      %62 = vector.load %arg11[%c0_40, %c0_41] : memref<1x128xf32, #tpu.memory_space<vmem>>, vector<1x128xf32>
      %63 = vector.broadcast %61 : vector<1x1xf32> to vector<1x128xf32>
      %64 = arith.mulf %62, %63 : vector<1x128xf32>
      %c0_42 = arith.constant 0 : index
      %c0_43 = arith.constant 0 : index
      %c0_44 = arith.constant 0 : index
      %65 = vector.load %arg9[%c0_42, %c0_43, %c0_44] : memref<1x1x128xf32, #tpu.memory_space<vmem>>, vector<1x1x128xf32>
      %66 = vector.shape_cast %65 : vector<1x1x128xf32> to vector<1x128xf32>
      %67 = vector.shape_cast %64 : vector<1x128xf32> to vector<1x1x128xf32>
      tpu.vector_store %arg9[%c0_42, %c0_43, %c0_44], %67 {strides = array<i32>} : memref<1x1x128xf32, #tpu.memory_space<vmem>>, vector<1x1x128xf32>,
      %c0_45 = arith.constant 0 : index
      %c0_46 = arith.constant 0 : index
      %c0_47 = arith.constant 0 : index
      %68 = vector.load %arg10[%c0_45, %c0_46, %c0_47] : memref<1x1x8xf32, #tpu.memory_space<vmem>>, vector<1x1x8xf32>
      %69 = vector.shape_cast %68 : vector<1x1x8xf32> to vector<1x8xf32>
      %c0_48 = arith.constant 0 : index
      %c0_49 = arith.constant 0 : index
      %70 = vector.load %arg12[%c0_48, %c0_49] : memref<1x1xf32, #tpu.memory_space<vmem>>, vector<1x1xf32>
      %71 = vector.broadcast %70 : vector<1x1xf32> to vector<1x8xf32>
      %72 = arith.subf %69, %71 : vector<1x8xf32>
      %73 = math.exp %72 : vector<1x8xf32>
      %74 = vector.broadcast %61 : vector<1x1xf32> to vector<1x8xf32>
      %75 = arith.mulf %73, %74 : vector<1x8xf32>
      %c0_50 = arith.constant 0 : index
      %c0_51 = arith.constant 0 : index
      %c0_52 = arith.constant 0 : index
      %76 = vector.load %arg10[%c0_50, %c0_51, %c0_52] : memref<1x1x8xf32, #tpu.memory_space<vmem>>, vector<1x1x8xf32>
      %77 = vector.shape_cast %76 : vector<1x1x8xf32> to vector<1x8xf32>
      %78 = vector.shape_cast %75 : vector<1x8xf32> to vector<1x1x8xf32>
      tpu.vector_store %arg10[%c0_50, %c0_51, %c0_52], %78 {strides = array<i32>} : memref<1x1x8xf32, #tpu.memory_space<vmem>>, vector<1x1x8xf32>,
    } else {
    }
    return
  }
  func.func @transform_0(%arg0: i32, %arg1: i32) -> (i32, i32, i32) {
    %c0_i32 = arith.constant 0 : i32
    %c0_i32_0 = arith.constant 0 : i32
    return %arg0, %arg1, %c0_i32 : i32, i32, i32
  }
  func.func @transform_1(%arg0: i32, %arg1: i32) -> (i32, i32, i32) {
    %c0_i32 = arith.constant 0 : i32
    %c0_i32_0 = arith.constant 0 : i32
    %c0_i32_1 = arith.constant 0 : i32
    return %arg0, %c0_i32, %c0_i32_0 : i32, i32, i32
  }
  func.func @transform_2(%arg0: i32, %arg1: i32) -> (i32, i32, i32) {
    %c0_i32 = arith.constant 0 : i32
    %c0_i32_0 = arith.constant 0 : i32
    %c0_i32_1 = arith.constant 0 : i32
    return %arg0, %c0_i32, %c0_i32_0 : i32, i32, i32
  }
  func.func @transform_3(%arg0: i32, %arg1: i32) -> (i32, i32) {
    %c0_i32 = arith.constant 0 : i32
    %c0_i32_0 = arith.constant 0 : i32
    %c0_i32_1 = arith.constant 0 : i32
    return %c0_i32, %c0_i32_0 : i32, i32
  }
  func.func @transform_4(%arg0: i32, %arg1: i32) -> (i32, i32) {
    %c0_i32 = arith.constant 0 : i32
    %c0_i32_0 = arith.constant 0 : i32
    %c0_i32_1 = arith.constant 0 : i32
    return %c0_i32, %c0_i32_0 : i32, i32
  }
  func.func @transform_5(%arg0: i32, %arg1: i32) -> (i32, i32) {
    %c0_i32 = arith.constant 0 : i32
    %c0_i32_0 = arith.constant 0 : i32
    %c0_i32_1 = arith.constant 0 : i32
    return %c0_i32, %c0_i32_0 : i32, i32
  }
  func.func @transform_6(%arg0: i32, %arg1: i32) -> (i32, i32) {
    %c0_i32 = arith.constant 0 : i32
    %c0_i32_0 = arith.constant 0 : i32
    %c0_i32_1 = arith.constant 0 : i32
    return %c0_i32, %c0_i32_0 : i32, i32
  }
  func.func @transform_7(%arg0: i32, %arg1: i32) -> (i32, i32, i32) {
    %c0_i32 = arith.constant 0 : i32
    %c0_i32_0 = arith.constant 0 : i32
    %c0_i32_1 = arith.constant 0 : i32
    return %arg0, %c0_i32, %c0_i32_0 : i32, i32, i32
  }
  func.func @transform_8(%arg0: i32, %arg1: i32) -> (i32, i32, i32) {
    %c0_i32 = arith.constant 0 : i32
    %c0_i32_0 = arith.constant 0 : i32
    %c0_i32_1 = arith.constant 0 : i32
    return %arg0, %c0_i32, %c0_i32_0 : i32, i32, i32
  }
}

</mosaic_0001>

<llo_original>
// kernel: tpu_custom_call.1
$region0: #{tpu_custom_call.1}
  #allocation0 [shape = 'u32[]', space=smem, size = 0x4, offset = 0x4, fixed_abs, tag = 'smem constant byte address 0x4 - core index']
  #allocation1 [shape = 'u32[72,128]{1,0:T(1,128)}', space=vmem, size = 0x9000, scoped, tag = 'internal scratch']
  #allocation2 [shape = 'f32[1,128]{1,0:T(1,128)}', space=vmem, size = 0x200, scoped, tag = 'scratch operand']
  #allocation3 [shape = 'f32[1,1]{1,0:T(1,128)}', space=vmem, size = 0x200, scoped, tag = 'scratch operand']
  #allocation4 [shape = 'f32[1,1]{1,0:T(1,128)}', space=vmem, size = 0x200, scoped, tag = 'scratch operand']
  %s0 = inlined_call_operand.hbm [shape: bf16[2,8,128], index: 0, kind: input, shape index: {}]
  %s1 = inlined_call_operand.hbm [shape: f32[2,1,128], index: 1, kind: input, shape index: {}]
  %s2 = inlined_call_operand.hbm [shape: f32[2,1,128], index: 2, kind: input, shape index: {}]
  %s3 = inlined_call_operand.hbm [shape: bf16[128,256], index: 3, kind: input, shape index: {}]
  %s4 = inlined_call_operand.hbm [shape: bf16[128,128], index: 4, kind: input, shape index: {}]
  %s5 = inlined_call_operand.vmem [shape: f32[1,128], index: 5, kind: input, shape index: {}]
  %s6 = inlined_call_operand.vmem [shape: f32[1,128], index: 6, kind: input, shape index: {}]
  %s7 = inlined_call_operand.hbm [shape: f32[2,1,128], index: 7, kind: output, shape index: {0}]
  %s8 = inlined_call_operand.hbm [shape: f32[2,1,8], index: 8, kind: output, shape index: {1}]
  %9 = xla_tuple %s7, %s8
  %s10 = sld [smem:[#allocation0]]
  $region97: #{tpu_custom_call.1} parent=0
    _
  %s12 = ssub.s32 1, %s10
  %s13 = scalar_select 0, %s12, %s10
  $region1: #{tpu_custom_call.1} parent=0
    #allocation5 [shape = 'u8[4096]{0}', space=vmem, size = 0x1000, scoped, tag = 'input window, operand 0']
    #allocation6 [shape = 's32[2]{0}', space=sflag, size = 0x8, scoped, tag = 'scoped memory for tpu_custom_call.1']
    #allocation7 [shape = 's32[2]{0}', space=sflag, size = 0x8, scoped, tag = 'scoped memory for tpu_custom_call.1']
    #allocation8 [shape = 'u8[1024]{0}', space=vmem, size = 0x400, scoped, tag = 'input window, operand 1']
    #allocation9 [shape = 's32[2]{0}', space=sflag, size = 0x8, scoped, tag = 'scoped memory for tpu_custom_call.1']
    #allocation10 [shape = 'u8[1024]{0}', space=vmem, size = 0x400, scoped, tag = 'input window, operand 2']
    #allocation11 [shape = 'u8[65536]{0}', space=vmem, size = 0x10000, scoped, tag = 'input window, operand 3, single buffered']
    #allocation12 [shape = 's32[1]{0}', space=sflag, size = 0x4, scoped, tag = 'scoped memory for tpu_custom_call.1']
    #allocation13 [shape = 'u8[32768]{0}', space=vmem, size = 0x8000, scoped, tag = 'input window, operand 4, single buffered']
    #allocation14 [shape = 'u8[1024]{0}', space=vmem, size = 0x400, scoped, tag = 'output window, operand 0']
    #allocation15 [shape = 'u8[1024]{0}', space=vmem, size = 0x400, scoped, tag = 'output window, operand 1']
    #allocation16 [shape = 's32[2]{0}', space=sflag, size = 0x8, scoped, tag = 'scoped memory for tpu_custom_call.1']
    %14 = vsyncpa [#allocation6], 0
    %s15 = scalar_lea.sflag [#allocation6], 1
    %16 = vsyncpa %s15, 0
    %17 = vsyncpa [#allocation9], 0
    %s18 = scalar_lea.sflag [#allocation9], 1
    %19 = vsyncpa %s18, 0
    %20 = vsyncpa [#allocation12], 0
    %21 = vsyncpa [#allocation7], 0
    %s22 = scalar_lea.sflag [#allocation7], 1
    %23 = vsyncpa %s22, 0
    %24 = vsyncpa [#allocation16], 0
    %s25 = scalar_lea.sflag [#allocation16], 1
    %26 = vsyncpa %s25, 0
    loop: start=0, step=1, limit=4
    $region2: #{tpu_custom_call.1} parent=1 // loop_pre_header
      _
    $region3: #{tpu_custom_call.1} parent=1 // loop_header
      %s28 = sphi 0, %s32
      %p29 = scmp.ge.s32.totalorder %s28, 4
      %s35 = sphi 0, %s47
      %s36 = sphi 0, %s43
      %s37 = sphi 0, %s35
      %s38 = sphi 0, %s36
      %s39 = sphi 0, %s37
      %s40 = sphi 0, %s38
      %s52 = sphi 0, %s54
      %s55 = sphi 0, %s52
      %s56 = sphi 0, %s55
      %s72 = sphi 0, %s56
      %s78 = sphi 0, %s80
      %s81 = sphi 0, %s78
      %s82 = sphi 0, %s81
      %s98 = sphi 0, %s82
      %s104 = sphi 0, %s106
      %s107 = sphi 0, %s104
      %s108 = sphi 0, %s107
      %s124 = sphi 0, %s108
      %s128 = sphi 0, %s128
      %s130 = sphi 0, %s128
      %s131 = sphi 0, %s130
      %s145 = sphi 0, %s131
      %s149 = sphi 0, %s149
      %s151 = sphi 0, %s149
      %s152 = sphi 0, %s151
      %s166 = sphi 0, %s152
      %s170 = sphi 0, %s170
      %s172 = sphi 0, %s170
      %s173 = sphi 0, %s172
      %s187 = sphi 0, %s173
      %s191 = sphi 0, %s191
      %s193 = sphi 0, %s191
      %s194 = sphi 0, %s193
      %s208 = sphi 0, %s194
      %s214 = sphi 0, %s216
      %s217 = sphi 0, %s214
      %s218 = sphi 0, %s217
      %s234 = sphi 0, %s218
      %s240 = sphi 0, %s242
      %s243 = sphi 0, %s240
      %s244 = sphi 0, %s243
      %s260 = sphi 0, %s244
    $region4: #{tpu_custom_call.1} parent=1 // loop_header_branch
      %31 = sbr.rel (%p29) target = $region8
    $region5: #{tpu_custom_call.1} parent=1 // loop_body
      %s33 = ssub.s32 %s28, 1
      %s34 = ssub.s32 %s28, 2
      %s41 = sadd.s32 1, %s36
      %p42 = scmp.ge.s32.totalorder %s41, 1
      %s43 = scalar_select %p42, 0, %s41
      %s44 = sadd.s32 1, %s35
      %s45 = scalar_select %p42, %s44, %s35
      %p46 = scmp.ge.s32.totalorder %s45, 2
      %s47 = scalar_select %p46, 0, %s45
      %s48 = ssub.s32 %s35, %s47
      %s49 = ssub.s32 %s36, %s43
      %s50 = sor.u32 %s48, %s49
      %p51 = scmp.eq.s32.totalorder %s50, 0
      %s53 = sadd.s32 %s52, 1
      %s54 = scalar_select %p51, %s52, %s53
      %p57 = pneg %p51
      %p58 = scmp.eq.s32.totalorder %s28, 1
      %p59 = por %p57, %p58
      %p60 = scmp.ne.s32.totalorder %s52, %s55
      %p61 = scmp.eq.s32.totalorder %s28, 0
      %p62 = por %p60, %p61
      %p63 = scmp.ne.s32.totalorder %s52, %s55
      %p64 = scmp.eq.s32.totalorder %s33, 1
      %p65 = por %p63, %p64
      %p66 = scmp.ne.s32.totalorder %s55, %s56
      %p67 = scmp.eq.s32.totalorder %s33, 0
      %p68 = por %p66, %p67
      %p69 = scmp.ne.s32.totalorder %s55, %s56
      %p70 = scmp.eq.s32.totalorder %s34, 1
      %p71 = por %p69, %p70
      %p73 = scmp.ne.s32.totalorder %s56, %s72
      %p74 = scmp.eq.s32.totalorder %s34, 0
      %p75 = por %p73, %p74
      %s76 = ssub.s32 %s35, %s47
      %p77 = scmp.eq.s32.totalorder %s76, 0
      %s79 = sadd.s32 %s78, 1
      %s80 = scalar_select %p77, %s78, %s79
      %p83 = pneg %p77
      %p84 = scmp.eq.s32.totalorder %s28, 1
      %p85 = por %p83, %p84
      %p86 = scmp.ne.s32.totalorder %s78, %s81
      %p87 = scmp.eq.s32.totalorder %s28, 0
      %p88 = por %p86, %p87
      %p89 = scmp.ne.s32.totalorder %s78, %s81
      %p90 = scmp.eq.s32.totalorder %s33, 1
      %p91 = por %p89, %p90
      %p92 = scmp.ne.s32.totalorder %s81, %s82
      %p93 = scmp.eq.s32.totalorder %s33, 0
      %p94 = por %p92, %p93
      %p95 = scmp.ne.s32.totalorder %s81, %s82
      %p96 = scmp.eq.s32.totalorder %s34, 1
      %p97 = por %p95, %p96
      %p99 = scmp.ne.s32.totalorder %s82, %s98
      %p100 = scmp.eq.s32.totalorder %s34, 0
      %p101 = por %p99, %p100
      %s102 = ssub.s32 %s35, %s47
      %p103 = scmp.eq.s32.totalorder %s102, 0
      %s105 = sadd.s32 %s104, 1
      %s106 = scalar_select %p103, %s104, %s105
      %p109 = pneg %p103
      %p110 = scmp.eq.s32.totalorder %s28, 1
      %p111 = por %p109, %p110
      %p112 = scmp.ne.s32.totalorder %s104, %s107
      %p113 = scmp.eq.s32.totalorder %s28, 0
      %p114 = por %p112, %p113
      %p115 = scmp.ne.s32.totalorder %s104, %s107
      %p116 = scmp.eq.s32.totalorder %s33, 1
      %p117 = por %p115, %p116
      %p118 = scmp.ne.s32.totalorder %s107, %s108
      %p119 = scmp.eq.s32.totalorder %s33, 0
      %p120 = por %p118, %p119
      %p121 = scmp.ne.s32.totalorder %s107, %s108
      %p122 = scmp.eq.s32.totalorder %s34, 1
      %p123 = por %p121, %p122
      %p125 = scmp.ne.s32.totalorder %s108, %s124
      %p126 = scmp.eq.s32.totalorder %s34, 0
      %p127 = por %p125, %p126
      %s129 = sadd.s32 %s128, 1
      %p132 = scmp.eq.s32.totalorder %s28, 1
      %p133 = scmp.ne.s32.totalorder %s128, %s130
      %p134 = scmp.eq.s32.totalorder %s28, 0
      %p135 = por %p133, %p134
      %p136 = scmp.ne.s32.totalorder %s128, %s130
      %p137 = scmp.eq.s32.totalorder %s33, 1
      %p138 = por %p136, %p137
      %p139 = scmp.ne.s32.totalorder %s130, %s131
      %p140 = scmp.eq.s32.totalorder %s33, 0
      %p141 = por %p139, %p140
      %p142 = scmp.ne.s32.totalorder %s130, %s131
      %p143 = scmp.eq.s32.totalorder %s34, 1
      %p144 = por %p142, %p143
      %p146 = scmp.ne.s32.totalorder %s131, %s145
      %p147 = scmp.eq.s32.totalorder %s34, 0
      %p148 = por %p146, %p147
      %s150 = sadd.s32 %s149, 1
      %p153 = scmp.eq.s32.totalorder %s28, 1
      %p154 = scmp.ne.s32.totalorder %s149, %s151
      %p155 = scmp.eq.s32.totalorder %s28, 0
      %p156 = por %p154, %p155
      %p157 = scmp.ne.s32.totalorder %s149, %s151
      %p158 = scmp.eq.s32.totalorder %s33, 1
      %p159 = por %p157, %p158
      %p160 = scmp.ne.s32.totalorder %s151, %s152
      %p161 = scmp.eq.s32.totalorder %s33, 0
      %p162 = por %p160, %p161
      %p163 = scmp.ne.s32.totalorder %s151, %s152
      %p164 = scmp.eq.s32.totalorder %s34, 1
      %p165 = por %p163, %p164
      %p167 = scmp.ne.s32.totalorder %s152, %s166
      %p168 = scmp.eq.s32.totalorder %s34, 0
      %p169 = por %p167, %p168
      %s171 = sadd.s32 %s170, 1
      %p174 = scmp.eq.s32.totalorder %s28, 1
      %p175 = scmp.ne.s32.totalorder %s170, %s172
      %p176 = scmp.eq.s32.totalorder %s28, 0
      %p177 = por %p175, %p176
      %p178 = scmp.ne.s32.totalorder %s170, %s172
      %p179 = scmp.eq.s32.totalorder %s33, 1
      %p180 = por %p178, %p179
      %p181 = scmp.ne.s32.totalorder %s172, %s173
      %p182 = scmp.eq.s32.totalorder %s33, 0
      %p183 = por %p181, %p182
      %p184 = scmp.ne.s32.totalorder %s172, %s173
      %p185 = scmp.eq.s32.totalorder %s34, 1
      %p186 = por %p184, %p185
      %p188 = scmp.ne.s32.totalorder %s173, %s187
      %p189 = scmp.eq.s32.totalorder %s34, 0
      %p190 = por %p188, %p189
      %s192 = sadd.s32 %s191, 1
      %p195 = scmp.eq.s32.totalorder %s28, 1
      %p196 = scmp.ne.s32.totalorder %s191, %s193
      %p197 = scmp.eq.s32.totalorder %s28, 0
      %p198 = por %p196, %p197
      %p199 = scmp.ne.s32.totalorder %s191, %s193
      %p200 = scmp.eq.s32.totalorder %s33, 1
      %p201 = por %p199, %p200
      %p202 = scmp.ne.s32.totalorder %s193, %s194
      %p203 = scmp.eq.s32.totalorder %s33, 0
      %p204 = por %p202, %p203
      %p205 = scmp.ne.s32.totalorder %s193, %s194
      %p206 = scmp.eq.s32.totalorder %s34, 1
      %p207 = por %p205, %p206
      %p209 = scmp.ne.s32.totalorder %s194, %s208
      %p210 = scmp.eq.s32.totalorder %s34, 0
      %p211 = por %p209, %p210
      %s212 = ssub.s32 %s35, %s47
      %p213 = scmp.eq.s32.totalorder %s212, 0
      %s215 = sadd.s32 %s214, 1
      %s216 = scalar_select %p213, %s214, %s215
      %p219 = pneg %p213
      %p220 = scmp.eq.s32.totalorder %s28, 1
      %p221 = por %p219, %p220
      %p222 = scmp.ne.s32.totalorder %s214, %s217
      %p223 = scmp.eq.s32.totalorder %s28, 0
      %p224 = por %p222, %p223
      %p225 = scmp.ne.s32.totalorder %s214, %s217
      %p226 = scmp.eq.s32.totalorder %s33, 1
      %p227 = por %p225, %p226
      %p228 = scmp.ne.s32.totalorder %s217, %s218
      %p229 = scmp.eq.s32.totalorder %s33, 0
      %p230 = por %p228, %p229
      %p231 = scmp.ne.s32.totalorder %s217, %s218
      %p232 = scmp.eq.s32.totalorder %s34, 1
      %p233 = por %p231, %p232
      %p235 = scmp.ne.s32.totalorder %s218, %s234
      %p236 = scmp.eq.s32.totalorder %s34, 0
      %p237 = por %p235, %p236
      %s238 = ssub.s32 %s35, %s47
      %p239 = scmp.eq.s32.totalorder %s238, 0
      %s241 = sadd.s32 %s240, 1
      %s242 = scalar_select %p239, %s240, %s241
      %p245 = pneg %p239
      %p246 = scmp.eq.s32.totalorder %s28, 1
      %p247 = por %p245, %p246
      %p248 = scmp.ne.s32.totalorder %s240, %s243
      %p249 = scmp.eq.s32.totalorder %s28, 0
      %p250 = por %p248, %p249
      %p251 = scmp.ne.s32.totalorder %s240, %s243
      %p252 = scmp.eq.s32.totalorder %s33, 1
      %p253 = por %p251, %p252
      %p254 = scmp.ne.s32.totalorder %s243, %s244
      %p255 = scmp.eq.s32.totalorder %s33, 0
      %p256 = por %p254, %p255
      %p257 = scmp.ne.s32.totalorder %s243, %s244
      %p258 = scmp.eq.s32.totalorder %s34, 1
      %p259 = por %p257, %p258
      %p261 = scmp.ne.s32.totalorder %s244, %s260
      %p262 = scmp.eq.s32.totalorder %s34, 0
      %p263 = por %p261, %p262
      %p264 = scmp.le.s32.totalorder 1, %s28
      %p265 = scmp.lt.s32.totalorder %s28, 3
      %p266 = pnand %p264, %p265
      %p267 = pneg %p266
      // Predicated region
      $region9: #{tpu_custom_call.1} parent=5 // pred_check
        _
      $region10: #{tpu_custom_call.1} parent=5 // pred_check_branch
        %269 = sbr.rel (%p266) target = $region12
      $region11: #{tpu_custom_call.1} parent=5 // pred_region
        %s270 = ssub.s32 %s28, 1
        // Predicated region
        $region13: #{tpu_custom_call.1} parent=11 // pred_check
          %p271 = pneg %p141
        $region14: #{tpu_custom_call.1} parent=11 // pred_check_branch
          %273 = sbr.rel (%p271) target = $region16
        $region15: #{tpu_custom_call.1} parent=11 // pred_region
          %275 = vsyncadd [#allocation12], 0
          %s276 = sshll.u32 %s3, 4
          %s277 = int_to_ptr.hbm [resolvable:$true] %s276
          %s278 = sshll.u32 [#allocation11], 4
          %s279 = int_to_ptr.vmem [resolvable:$true] %s278
          %284 = dma.hbm_to_vmem [thread:$0]  %s277, 2048, %s279, [#allocation12], 128, 128, 8
        $region16: #{tpu_custom_call.1} parent=11 // pred_fallthru
          _
        // Predicated region
        $region17: #{tpu_custom_call.1} parent=11 // pred_check
          %p285 = pneg %p162
        $region18: #{tpu_custom_call.1} parent=11 // pred_check_branch
          %287 = sbr.rel (%p285) target = $region20
        $region19: #{tpu_custom_call.1} parent=11 // pred_region
          %289 = vsyncadd [#allocation12], 0
          %s290 = sshll.u32 %s4, 4
          %s291 = int_to_ptr.hbm [resolvable:$true] %s290
          %s292 = sshll.u32 [#allocation13], 4
          %s293 = int_to_ptr.vmem [resolvable:$true] %s292
          %298 = dma.hbm_to_vmem [thread:$0]  %s291, 1024, %s293, [#allocation12], 64, 64, 4
        $region20: #{tpu_custom_call.1} parent=11 // pred_fallthru
          _
        // Predicated region
        $region21: #{tpu_custom_call.1} parent=11 // pred_check
          %p299 = pneg %p183
        $region22: #{tpu_custom_call.1} parent=11 // pred_check_branch
          %301 = sbr.rel (%p299) target = $region24
        $region23: #{tpu_custom_call.1} parent=11 // pred_region
          _
        $region24: #{tpu_custom_call.1} parent=11 // pred_fallthru
          _
        // Predicated region
        $region25: #{tpu_custom_call.1} parent=11 // pred_check
          %p302 = pneg %p204
        $region26: #{tpu_custom_call.1} parent=11 // pred_check_branch
          %304 = sbr.rel (%p302) target = $region28
        $region27: #{tpu_custom_call.1} parent=11 // pred_region
          _
        $region28: #{tpu_custom_call.1} parent=11 // pred_fallthru
          _
      $region12: #{tpu_custom_call.1} parent=5 // pred_fallthru
        _
      %p305 = scmp.lt.s32.totalorder %s28, 2
      // Predicated region
      $region29: #{tpu_custom_call.1} parent=5 // pred_check
        %p306 = pneg %p305
      $region30: #{tpu_custom_call.1} parent=5 // pred_check_branch
        %308 = sbr.rel (%p306) target = $region32
      $region31: #{tpu_custom_call.1} parent=5 // pred_region
        // Predicated region
        $region33: #{tpu_custom_call.1} parent=31 // pred_check
          %p309 = pneg %p62
        $region34: #{tpu_custom_call.1} parent=31 // pred_check_branch
          %311 = sbr.rel (%p309) target = $region36
        $region35: #{tpu_custom_call.1} parent=31 // pred_region
          %s312 = sand.u32 %s52, 1
          %s313 = scalar_lea.sflag [#allocation6], %s312
          %s314 = sand.u32 %s52, 1
          %s315 = smul.addr %s314, 4
          %s316 = scalar_lea.vmem [#allocation5], %s315
          %318 = vsyncadd %s313, 0
          %s319 = sadd.s32 %s36, %s35
          %s320 = smul.addr %s319, 4
          %s321 = scalar_lea.hbm %s0, %s320
          %s323 = sshll.u32 %s321, 4
          %s324 = int_to_ptr.hbm [resolvable:$true] %s323
          %s325 = sshll.u32 %s316, 4
          %s326 = int_to_ptr.vmem [resolvable:$true] %s325
          %328 = dma.hbm_to_vmem [thread:$0]  %s324, 64, %s326, %s313
        $region36: #{tpu_custom_call.1} parent=31 // pred_fallthru
          _
        // Predicated region
        $region37: #{tpu_custom_call.1} parent=31 // pred_check
          %p329 = pneg %p88
        $region38: #{tpu_custom_call.1} parent=31 // pred_check_branch
          %331 = sbr.rel (%p329) target = $region40
        $region39: #{tpu_custom_call.1} parent=31 // pred_region
          %s332 = sand.u32 %s28, 1
          %s333 = scalar_lea.sflag [#allocation9], %s332
          %s334 = sand.u32 %s78, 1
          %s335 = scalar_lea.vmem [#allocation8], %s334
          %337 = vsyncadd %s333, 0
          %s338 = scalar_lea.hbm %s1, %s35
          %s340 = sshll.u32 %s338, 4
          %s341 = int_to_ptr.hbm [resolvable:$true] %s340
          %s342 = sshll.u32 %s335, 4
          %s343 = int_to_ptr.vmem [resolvable:$true] %s342
          %345 = dma.hbm_to_vmem [thread:$0]  %s341, 16, %s343, %s333
        $region40: #{tpu_custom_call.1} parent=31 // pred_fallthru
          _
        // Predicated region
        $region41: #{tpu_custom_call.1} parent=31 // pred_check
          %p346 = pneg %p114
        $region42: #{tpu_custom_call.1} parent=31 // pred_check_branch
          %348 = sbr.rel (%p346) target = $region44
        $region43: #{tpu_custom_call.1} parent=31 // pred_region
          %s349 = sand.u32 %s28, 1
          %s350 = scalar_lea.sflag [#allocation9], %s349
          %s351 = sand.u32 %s104, 1
          %s352 = scalar_lea.vmem [#allocation10], %s351
          %354 = vsyncadd %s350, 0
          %s355 = scalar_lea.hbm %s2, %s35
          %s357 = sshll.u32 %s355, 4
          %s358 = int_to_ptr.hbm [resolvable:$true] %s357
          %s359 = sshll.u32 %s352, 4
          %s360 = int_to_ptr.vmem [resolvable:$true] %s359
          %362 = dma.hbm_to_vmem [thread:$0]  %s358, 16, %s360, %s350
        $region44: #{tpu_custom_call.1} parent=31 // pred_fallthru
          _
      $region32: #{tpu_custom_call.1} parent=5 // pred_fallthru
        _
      %p363 = scmp.le.s32.totalorder 1, %s28
      %p364 = scmp.lt.s32.totalorder %s28, 3
      %p365 = pnand %p363, %p364
      %p366 = pneg %p365
      // Predicated region
      $region45: #{tpu_custom_call.1} parent=5 // pred_check
        _
      $region46: #{tpu_custom_call.1} parent=5 // pred_check_branch
        %368 = sbr.rel (%p365) target = $region48
      $region47: #{tpu_custom_call.1} parent=5 // pred_region
        %s369 = ssub.s32 %s28, 1
        %s370 = sand.u32 %s55, 1
        %s371 = scalar_lea.sflag [#allocation6], %s370
        %s372 = sand.u32 %s55, 1
        %s373 = smul.addr %s372, 4
        %s374 = scalar_lea.vmem [#allocation5], %s373
        // Predicated region
        $region49: #{tpu_custom_call.1} parent=47 // pred_check
          %p375 = pneg %p68
        $region50: #{tpu_custom_call.1} parent=47 // pred_check_branch
          %377 = sbr.rel (%p375) target = $region52
        $region51: #{tpu_custom_call.1} parent=47 // pred_region
          %379 = dma.done %s371, 64
        $region52: #{tpu_custom_call.1} parent=47 // pred_fallthru
          _
        %s380 = sand.u32 %s33, 1
        %s381 = scalar_lea.sflag [#allocation9], %s380
        %s382 = sand.u32 %s81, 1
        %s383 = scalar_lea.vmem [#allocation8], %s382
        // Predicated region
        $region53: #{tpu_custom_call.1} parent=47 // pred_check
          %p384 = pneg %p94
        $region54: #{tpu_custom_call.1} parent=47 // pred_check_branch
          %386 = sbr.rel (%p384) target = $region56
        $region55: #{tpu_custom_call.1} parent=47 // pred_region
          %388 = dma.done %s381, 16
        $region56: #{tpu_custom_call.1} parent=47 // pred_fallthru
          _
        %s389 = sand.u32 %s33, 1
        %s390 = scalar_lea.sflag [#allocation9], %s389
        %s391 = sand.u32 %s107, 1
        %s392 = scalar_lea.vmem [#allocation10], %s391
        // Predicated region
        $region57: #{tpu_custom_call.1} parent=47 // pred_check
          %p393 = pneg %p120
        $region58: #{tpu_custom_call.1} parent=47 // pred_check_branch
          %395 = sbr.rel (%p393) target = $region60
        $region59: #{tpu_custom_call.1} parent=47 // pred_region
          %397 = dma.done %s390, 16
        $region60: #{tpu_custom_call.1} parent=47 // pred_fallthru
          _
        // Predicated region
        $region61: #{tpu_custom_call.1} parent=47 // pred_check
          %p398 = pneg %p141
        $region62: #{tpu_custom_call.1} parent=47 // pred_check_branch
          %400 = sbr.rel (%p398) target = $region64
        $region63: #{tpu_custom_call.1} parent=47 // pred_region
          %402 = dma.done [#allocation12], 2048
        $region64: #{tpu_custom_call.1} parent=47 // pred_fallthru
          _
        // Predicated region
        $region65: #{tpu_custom_call.1} parent=47 // pred_check
          %p403 = pneg %p162
        $region66: #{tpu_custom_call.1} parent=47 // pred_check_branch
          %405 = sbr.rel (%p403) target = $region68
        $region67: #{tpu_custom_call.1} parent=47 // pred_region
          %407 = dma.done [#allocation12], 1024
        $region68: #{tpu_custom_call.1} parent=47 // pred_fallthru
          _
        %s408 = sand.u32 %s55, 1
        %s409 = scalar_lea.sflag [#allocation6], %s408
        %s410 = sand.u32 %s55, 1
        %s411 = smul.addr %s410, 4
        %s412 = scalar_lea.vmem [#allocation5], %s411
        %p413 = pneg %p68
        %p414 = pneg %p65
        %s415 = sand.u32 %s33, 1
        %s416 = scalar_lea.sflag [#allocation9], %s415
        %s417 = sand.u32 %s81, 1
        %s418 = scalar_lea.vmem [#allocation8], %s417
        %p419 = pneg %p94
        %p420 = pneg %p91
        %s421 = sand.u32 %s33, 1
        %s422 = scalar_lea.sflag [#allocation9], %s421
        %s423 = sand.u32 %s107, 1
        %s424 = scalar_lea.vmem [#allocation10], %s423
        %p425 = pneg %p120
        %p426 = pneg %p117
        %p427 = pneg %p141
        %p428 = pneg %p138
        %p429 = pneg %p162
        %p430 = pneg %p159
        %p431 = pneg %p183
        %p432 = pneg %p180
        %p433 = pneg %p204
        %p434 = pneg %p201
        %p435 = pneg %p230
        %p436 = pneg %p227
        %s437 = sand.u32 %s217, 1
        %s438 = scalar_lea.sflag [#allocation7], %s437
        %s439 = sand.u32 %s217, 1
        %s440 = scalar_lea.vmem [#allocation14], %s439
        %p441 = pneg %p256
        %p442 = pneg %p253
        %s443 = sand.u32 %s243, 1
        %s444 = scalar_lea.sflag [#allocation16], %s443
        %s445 = sand.u32 %s243, 1
        %s446 = scalar_lea.vmem [#allocation15], %s445
        %p448 = scmp.eq.s32.totalorder %s38, 0
        // Predicated region
        $region69: #{tpu_custom_call.1} parent=47 // pred_check
          %p449 = pneg %p448
        $region70: #{tpu_custom_call.1} parent=47 // pred_check_branch
          %451 = sbr.rel (%p449) target = $region72
        $region71: #{tpu_custom_call.1} parent=47 // pred_region
          %vm452 = vcmask 0
          %453 = vst.msk [vmem:[#allocation3] sm:$0x1] %vm452, -inf
          %454 = vst.msk [vmem:[#allocation4] sm:$0x1] %vm452, 0.0
          %455 = vst [vmem:[#allocation2] sm:$0x1] 0.0
        $region72: #{tpu_custom_call.1} parent=47 // pred_fallthru
          _
        %v456 = vld [vmem:[%s374] sm:$0xf]
        %v457 = vld [vmem:[#allocation11] sm:$0xff]
        %v458 = vld [vmem:[#allocation11 + $0x8] sm:$0xff]
        %v459 = vld [vmem:[#allocation11 + $0x10] sm:$0xff]
        %v460 = vld [vmem:[#allocation11 + $0x18] sm:$0xff]
        %v461 = vld [vmem:[#allocation11 + $0x20] sm:$0xff]
        %v462 = vld [vmem:[#allocation11 + $0x28] sm:$0xff]
        %v463 = vld [vmem:[#allocation11 + $0x30] sm:$0xff]
        %v464 = vld [vmem:[#allocation11 + $0x38] sm:$0xff]
        %v465 = vld [vmem:[#allocation11 + $0x40] sm:$0xff]
        %v466 = vld [vmem:[#allocation11 + $0x48] sm:$0xff]
        %v467 = vld [vmem:[#allocation11 + $0x50] sm:$0xff]
        %v468 = vld [vmem:[#allocation11 + $0x58] sm:$0xff]
        %v469 = vld [vmem:[#allocation11 + $0x60] sm:$0xff]
        %v470 = vld [vmem:[#allocation11 + $0x68] sm:$0xff]
        %v471 = vld [vmem:[#allocation11 + $0x70] sm:$0xff]
        %v472 = vld [vmem:[#allocation11 + $0x78] sm:$0xff]
        %v489 = vunpack.c.l.b16 %v457
        %v490 = vunpack.c.h.b16 %v457
        %v491 = vunpack.c.l.b16 %v458
        %v492 = vunpack.c.h.b16 %v458
        %v493 = vunpack.c.l.b16 %v459
        %v494 = vunpack.c.h.b16 %v459
        %v495 = vunpack.c.l.b16 %v460
        %v496 = vunpack.c.h.b16 %v460
        %v497 = vunpack.c.l.b16 %v461
        %v498 = vunpack.c.h.b16 %v461
        %v499 = vunpack.c.l.b16 %v462
        %v500 = vunpack.c.h.b16 %v462
        %v501 = vunpack.c.l.b16 %v463
        %v502 = vunpack.c.h.b16 %v463
        %v503 = vunpack.c.l.b16 %v464
        %v504 = vunpack.c.h.b16 %v464
        %v505 = vunpack.c.l.b16 %v465
        %v506 = vunpack.c.h.b16 %v465
        %v507 = vunpack.c.l.b16 %v466
        %v508 = vunpack.c.h.b16 %v466
        %v509 = vunpack.c.l.b16 %v467
        %v510 = vunpack.c.h.b16 %v467
        %v511 = vunpack.c.l.b16 %v468
        %v512 = vunpack.c.h.b16 %v468
        %v513 = vunpack.c.l.b16 %v469
        %v514 = vunpack.c.h.b16 %v469
        %v515 = vunpack.c.l.b16 %v470
        %v516 = vunpack.c.h.b16 %v470
        %v517 = vunpack.c.l.b16 %v471
        %v518 = vunpack.c.h.b16 %v471
        %v519 = vunpack.c.l.b16 %v472
        %v520 = vunpack.c.h.b16 %v472
        %v521 = vpack.c.b16 %v491, %v489
        %v522 = vpack.c.b16 %v492, %v490
        %v523 = vpack.c.b16 %v495, %v493
        %v524 = vpack.c.b16 %v496, %v494
        %v525 = vpack.c.b16 %v499, %v497
        %v526 = vpack.c.b16 %v500, %v498
        %v527 = vpack.c.b16 %v503, %v501
        %v528 = vpack.c.b16 %v504, %v502
        %v529 = vpack.c.b16 %v507, %v505
        %v530 = vpack.c.b16 %v508, %v506
        %v531 = vpack.c.b16 %v511, %v509
        %v532 = vpack.c.b16 %v512, %v510
        %v533 = vpack.c.b16 %v515, %v513
        %v534 = vpack.c.b16 %v516, %v514
        %v535 = vpack.c.b16 %v519, %v517
        %v536 = vpack.c.b16 %v520, %v518
        %553 = vmatpush.bf16.msra.mxu0 %v535
        %554 = vmatpush.bf16.msra.mxu0 %v533
        %555 = vmatpush.bf16.msra.mxu0 %v531
        %556 = vmatpush.bf16.msra.mxu0 %v529
        %557 = vmatpush.bf16.msra.mxu0 %v527
        %558 = vmatpush.bf16.msra.mxu0 %v525
        %559 = vmatpush.bf16.msra.mxu0 %v523
        %560 = vmatpush.bf16.msra.mxu0 %v521
        %561 = vmatmul.bf16.gmra.mxu0 %v456
        %v562 = vpop.f32.mrf.mxu0
        %v563 = vadd.f32 0.0, %v562
        %v564 = vpop.f32.mrf.mxu0
        %565 = vdwg.mxu0
        %566 = vmatpush.bf16.msra.mxu0 %v536
        %567 = vmatpush.bf16.msra.mxu0 %v534
        %568 = vmatpush.bf16.msra.mxu0 %v532
        %569 = vmatpush.bf16.msra.mxu0 %v530
        %570 = vmatpush.bf16.msra.mxu0 %v528
        %571 = vmatpush.bf16.msra.mxu0 %v526
        %572 = vmatpush.bf16.msra.mxu0 %v524
        %573 = vmatpush.bf16.msra.mxu0 %v522
        %574 = vmatmul.bf16.gmra.mxu0 %v456
        %v575 = vpop.f32.mrf.mxu0
        %v576 = vadd.f32 0.0, %v575
        %v577 = vpop.f32.mrf.mxu0
        %578 = vdwg.mxu0
        %v579 = vld [vmem:[%s5] sm:$0x1]
        %v581 = vperm.slane %v579, 0
        %v583 = vadd.f32 %v563, %v581
        %v584 = vld [vmem:[%s383] sm:$0x1]
        %v586 = vperm.slane %v584, 0
        %v588 = vmul.f32 %v586, %v583
        %v589 = vpack.c.bf16 %v588, %v588
        %v590 = vld [vmem:[#allocation13] sm:$0xf]
        %v591 = vld [vmem:[#allocation13 + $0x4] sm:$0xf]
        %v592 = vld [vmem:[#allocation13 + $0x8] sm:$0xf]
        %v593 = vld [vmem:[#allocation13 + $0xc] sm:$0xf]
        %v594 = vld [vmem:[#allocation13 + $0x10] sm:$0xf]
        %v595 = vld [vmem:[#allocation13 + $0x14] sm:$0xf]
        %v596 = vld [vmem:[#allocation13 + $0x18] sm:$0xf]
        %v597 = vld [vmem:[#allocation13 + $0x1c] sm:$0xf]
        %v598 = vld [vmem:[#allocation13 + $0x20] sm:$0xf]
        %v599 = vld [vmem:[#allocation13 + $0x24] sm:$0xf]
        %v600 = vld [vmem:[#allocation13 + $0x28] sm:$0xf]
        %v601 = vld [vmem:[#allocation13 + $0x2c] sm:$0xf]
        %v602 = vld [vmem:[#allocation13 + $0x30] sm:$0xf]
        %v603 = vld [vmem:[#allocation13 + $0x34] sm:$0xf]
        %v604 = vld [vmem:[#allocation13 + $0x38] sm:$0xf]
        %v605 = vld [vmem:[#allocation13 + $0x3c] sm:$0xf]
        %v622 = vunpack.c.l.b16 %v590
        %v623 = vunpack.c.l.b16 %v591
        %v624 = vunpack.c.l.b16 %v592
        %v625 = vunpack.c.l.b16 %v593
        %v626 = vunpack.c.l.b16 %v594
        %v627 = vunpack.c.l.b16 %v595
        %v628 = vunpack.c.l.b16 %v596
        %v629 = vunpack.c.l.b16 %v597
        %v630 = vunpack.c.l.b16 %v598
        %v631 = vunpack.c.l.b16 %v599
        %v632 = vunpack.c.l.b16 %v600
        %v633 = vunpack.c.l.b16 %v601
        %v634 = vunpack.c.l.b16 %v602
        %v635 = vunpack.c.l.b16 %v603
        %v636 = vunpack.c.l.b16 %v604
        %v637 = vunpack.c.l.b16 %v605
        %v638 = vpack.c.b16 %v623, %v622
        %v639 = vpack.c.b16 %v625, %v624
        %v640 = vpack.c.b16 %v627, %v626
        %v641 = vpack.c.b16 %v629, %v628
        %v642 = vpack.c.b16 %v631, %v630
        %v643 = vpack.c.b16 %v633, %v632
        %v644 = vpack.c.b16 %v635, %v634
        %v645 = vpack.c.b16 %v637, %v636
        %654 = vmatpush.bf16.msra.mxu0 %v645
        %655 = vmatpush.bf16.msra.mxu0 %v644
        %656 = vmatpush.bf16.msra.mxu0 %v643
        %657 = vmatpush.bf16.msra.mxu0 %v642
        %658 = vmatpush.bf16.msra.mxu0 %v641
        %659 = vmatpush.bf16.msra.mxu0 %v640
        %660 = vmatpush.bf16.msra.mxu0 %v639
        %661 = vmatpush.bf16.msra.mxu0 %v638
        %662 = vmatmul.bf16.gmra.mxu0 %v589
        %v663 = vpop.f32.mrf.mxu0
        %v664 = vadd.f32 %v576, %v663
        %v665 = vpop.f32.mrf.mxu0
        %666 = vdwg.mxu0
        %v667 = vld [vmem:[%s6] sm:$0x1]
        %v669 = vperm.slane %v667, 0
        %v671 = vadd.f32 %v664, %v669
        %v672 = vld [vmem:[%s392] sm:$0x1]
        %v674 = vperm.slane %v672, 0
        %v676 = vmul.f32 %v671, %v674
        %677 = vadd.xlane.f32.xlu0 %v676
        %v678 = vpop.xlane.xlu0 %677
        %679 = vxpose.xlu0.b32.start [1/16] %v678, 128
        %680 = vxpose.xlu0.b32.cont [2/16] 0.0, 128
        %681 = vxpose.xlu0.b32.cont [3/16] 0.0, 128
        %682 = vxpose.xlu0.b32.cont [4/16] 0.0, 128
        %683 = vxpose.xlu0.b32.cont [5/16] 0.0, 128
        %684 = vxpose.xlu0.b32.cont [6/16] 0.0, 128
        %685 = vxpose.xlu0.b32.cont [7/16] 0.0, 128
        %686 = vxpose.xlu0.b32.cont [8/16] 0.0, 128
        %687 = vxpose.xlu0.b32.cont [9/16] 0.0, 128
        %688 = vxpose.xlu0.b32.cont [10/16] 0.0, 128
        %689 = vxpose.xlu0.b32.cont [11/16] 0.0, 128
        %690 = vxpose.xlu0.b32.cont [12/16] 0.0, 128
        %691 = vxpose.xlu0.b32.cont [13/16] 0.0, 128
        %692 = vxpose.xlu0.b32.cont [14/16] 0.0, 128
        %693 = vxpose.xlu0.b32.cont [15/16] 0.0, 128
        %694 = vxpose.xlu0.b32.end [16/16] 0.0, 128
        %v695 = vpop.trf.xlu0
        %v696 = vpop.trf.xlu0
        %v697 = vpop.trf.xlu0
        %v698 = vpop.trf.xlu0
        %v699 = vpop.trf.xlu0
        %v700 = vpop.trf.xlu0
        %v701 = vpop.trf.xlu0
        %v702 = vpop.trf.xlu0
        %v703 = vpop.trf.xlu0
        %v704 = vpop.trf.xlu0
        %v705 = vpop.trf.xlu0
        %v706 = vpop.trf.xlu0
        %v707 = vpop.trf.xlu0
        %v708 = vpop.trf.xlu0
        %v709 = vpop.trf.xlu0
        %v710 = vpop.trf.xlu0
        %s711 = scalar_lea.vmem %s446, %s38 [#allocation15]
        %vm712 = vcmask 57344
        %713 = vst.msk [vmem:[%s711] sm:$0x1] %vm712, %v695
        %v714 = vld [vmem:[#allocation3] sm:$0x1]
        %v715 = vsel %vm712, %v695, -inf
        %716 = vmax.xlane.f32.xlu0 %v715
        %v717 = vpop.xlane.xlu0 %716
        %v718 = vmax.f32 %v714, %v717
        %v719 = vsub.f32 %v714, %v718
        %v720 = vmul.f32 %v719, 1.442695
        %v721 = vpow.pop %v720
        %723 = vset.pattern.permute.xlu0 0
        %724 = vperm.xlu0 %723, %v718
        %v725 = vpop.permute.xlu0 %724
        %v727 = vperm.slane %v725, 0
        %v728 = vsub.f32 %v695, %v727
        %v729 = vmul.f32 %v728, 1.442695
        %v730 = vpow.pop %v729
        %v731 = vld [vmem:[#allocation4] sm:$0x1]
        %v732 = vmul.f32 %v721, %v731
        %v733 = vsel %vm712, %v730, 0.0
        %734 = vadd.xlane.f32.xlu0 %v733
        %v735 = vpop.xlane.xlu0 %734
        %v736 = vadd.f32 %v732, %v735
        %vm737 = vcmask 0
        %738 = vst.msk [vmem:[#allocation4] sm:$0x1] %vm737, %v736
        %v739 = vld [vmem:[#allocation2] sm:$0x1]
        %741 = vset.pattern.permute.xlu0 0
        %742 = vperm.xlu0 %741, %v721
        %v743 = vpop.permute.xlu0 %742
        %v745 = vperm.slane %v743, 0
        %v746 = vmul.f32 %v745, %v739
        %v747 = vpack.c.bf16 %v730, %v730
        %vm748 = vcmask 64512
        %v750 = vsel %vm748, %v747, 0
        %vm752 = vcmask 1043456
        %v754 = vsel %vm752, %v456, 0
        %756 = vmatpush.bf16.msra.mxu0 0
        %757 = vmatpush.bf16.msra.mxu0 0
        %758 = vmatpush.bf16.msra.mxu0 0
        %759 = vmatpush.bf16.msra.mxu0 0
        %760 = vmatpush.bf16.msra.mxu0 0
        %761 = vmatpush.bf16.msra.mxu0 0
        %762 = vmatpush.bf16.msra.mxu0 0
        %763 = vmatpush.bf16.msra.mxu0 %v754
        %764 = vmatmul.bf16.gmra.mxu0 %v750
        %v765 = vpop.f32.mrf.mxu0
        %v766 = vadd.f32 0.0, %v765
        %v767 = vpop.f32.mrf.mxu0
        %768 = vdwg.mxu0
        %v769 = vadd.f32 %v746, %v766
        %770 = vst [vmem:[#allocation2] sm:$0x1] %v769
        %771 = vst.msk [vmem:[#allocation3] sm:$0x1] %vm737, %v718
        // Predicated region
        $region73: #{tpu_custom_call.1} parent=47 // pred_check
          %p772 = pneg %p448
        $region74: #{tpu_custom_call.1} parent=47 // pred_check_branch
          %774 = sbr.rel (%p772) target = $region76
        $region75: #{tpu_custom_call.1} parent=47 // pred_region
          %v775 = vld [vmem:[#allocation4] sm:$0x1]
          %v776 = vrcp.pop %v775
          %v777 = vmul.f32 %v775, %v776
          %v778 = vsub.f32 1.0, %v777
          %v779 = vmul.f32 %v776, %v778
          %v780 = vadd.f32 %v776, %v779
          %vm781 = vweird.f32 %v775
          %vm782 = vweird.f32 %v776
          %vm783 = vmor %vm781, %vm782
          %v784 = vsel %vm783, %v776, %v780
          %v785 = vand.u32 2147483647, %v775
          %vm786 = vcmp.eq.f32.partialorder %v785, 8.507059e+37
          %v787 = vand.u32 %v775, 2147483648
          %v788 = vor.u32 1.1754944e-38, %v787
          %v789 = vsel %vm786, %v788, %v784
          %v790 = vld [vmem:[#allocation2] sm:$0x1]
          %792 = vset.pattern.permute.xlu0 0
          %793 = vperm.xlu0 %792, %v789
          %v794 = vpop.permute.xlu0 %793
          %v796 = vperm.slane %v794, 0
          %v797 = vmul.f32 %v790, %v796
          %798 = vst [vmem:[%s440] sm:$0x1] %v797
          %v799 = vld [vmem:[%s446] sm:$0x1]
          %v800 = vld [vmem:[#allocation3] sm:$0x1]
          %802 = vset.pattern.permute.xlu0 0
          %803 = vperm.xlu0 %802, %v800
          %v804 = vpop.permute.xlu0 %803
          %v806 = vperm.slane %v804, 0
          %v807 = vsub.f32 %v799, %v806
          %v808 = vmul.f32 %v807, 1.442695
          %v809 = vpow.pop %v808
          %v810 = vmul.f32 %v809, %v796
          %811 = vst.msk [vmem:[%s446] sm:$0x1] %vm712, %v810
        $region76: #{tpu_custom_call.1} parent=47 // pred_fallthru
          _
        %s812 = sand.u32 %s217, 1
        %s813 = scalar_lea.sflag [#allocation7], %s812
        %s814 = sand.u32 %s217, 1
        %s815 = scalar_lea.vmem [#allocation14], %s814
        %s816 = sand.u32 %s243, 1
        %s817 = scalar_lea.sflag [#allocation16], %s816
        %s818 = sand.u32 %s243, 1
        %s819 = scalar_lea.vmem [#allocation15], %s818
        // Predicated region
        $region77: #{tpu_custom_call.1} parent=47 // pred_check
          %p820 = pneg %p227
        $region78: #{tpu_custom_call.1} parent=47 // pred_check_branch
          %822 = sbr.rel (%p820) target = $region80
        $region79: #{tpu_custom_call.1} parent=47 // pred_region
          %824 = vsyncadd %s813, 0
          %s825 = scalar_lea.hbm %s7, %s37
          %s827 = sshll.u32 %s815, 4
          %s828 = int_to_ptr.vmem [resolvable:$true] %s827
          %s829 = sshll.u32 %s825, 4
          %s830 = int_to_ptr.hbm [resolvable:$true] %s829
          %832 = dma.vmem_to_hbm [thread:$0]  %s828, 16, %s830, %s813
        $region80: #{tpu_custom_call.1} parent=47 // pred_fallthru
          _
        // Predicated region
        $region81: #{tpu_custom_call.1} parent=47 // pred_check
          %p833 = pneg %p253
        $region82: #{tpu_custom_call.1} parent=47 // pred_check_branch
          %835 = sbr.rel (%p833) target = $region84
        $region83: #{tpu_custom_call.1} parent=47 // pred_region
          %837 = vsyncadd %s817, 0
          %s838 = scalar_lea.hbm %s8, %s37
          %s840 = sshll.u32 %s819, 4
          %s841 = int_to_ptr.vmem [resolvable:$true] %s840
          %s842 = sshll.u32 %s838, 4
          %s843 = int_to_ptr.hbm [resolvable:$true] %s842
          %845 = dma.vmem_to_hbm [thread:$0]  %s841, 16, %s843, %s817
        $region84: #{tpu_custom_call.1} parent=47 // pred_fallthru
          _
      $region48: #{tpu_custom_call.1} parent=5 // pred_fallthru
        _
      %p846 = scmp.le.s32.totalorder 2, %s28
      // Predicated region
      $region85: #{tpu_custom_call.1} parent=5 // pred_check
        %p847 = pneg %p846
      $region86: #{tpu_custom_call.1} parent=5 // pred_check_branch
        %849 = sbr.rel (%p847) target = $region88
      $region87: #{tpu_custom_call.1} parent=5 // pred_region
        %s850 = ssub.s32 %s28, 2
        // Predicated region
        $region89: #{tpu_custom_call.1} parent=87 // pred_check
          %p851 = pneg %p233
        $region90: #{tpu_custom_call.1} parent=87 // pred_check_branch
          %853 = sbr.rel (%p851) target = $region92
        $region91: #{tpu_custom_call.1} parent=87 // pred_region
          %s854 = sand.u32 %s218, 1
          %s855 = scalar_lea.sflag [#allocation7], %s854
          %s856 = sand.u32 %s218, 1
          %s857 = scalar_lea.vmem [#allocation14], %s856
          %859 = dma.done %s855, 16
        $region92: #{tpu_custom_call.1} parent=87 // pred_fallthru
          _
        // Predicated region
        $region93: #{tpu_custom_call.1} parent=87 // pred_check
          %p860 = pneg %p259
        $region94: #{tpu_custom_call.1} parent=87 // pred_check_branch
          %862 = sbr.rel (%p860) target = $region96
        $region95: #{tpu_custom_call.1} parent=87 // pred_region
          %s863 = sand.u32 %s244, 1
          %s864 = scalar_lea.sflag [#allocation16], %s863
          %s865 = sand.u32 %s244, 1
          %s866 = scalar_lea.vmem [#allocation15], %s865
          %868 = dma.done %s864, 16
        $region96: #{tpu_custom_call.1} parent=87 // pred_fallthru
          _
      $region88: #{tpu_custom_call.1} parent=5 // pred_fallthru
        _
    $region6: #{tpu_custom_call.1} parent=1 // loop_footer
      %s32 = sadd.s32 1, %s28
    $region7: #{tpu_custom_call.1} parent=1 // loop_footer_branch
      %27 = sbr.rel target = $region3
    $region8: #{tpu_custom_call.1} parent=1 // loop_exit
      _
    %869 = vsyncpa [#allocation6], 1
    %s870 = scalar_lea.sflag [#allocation6], 1
    %871 = vsyncpa %s870, 1
    %872 = vsyncpa [#allocation9], 1
    %s873 = scalar_lea.sflag [#allocation9], 1
    %874 = vsyncpa %s873, 1
    %875 = vsyncpa [#allocation12], 1
    %876 = vsyncpa [#allocation7], 1
    %s877 = scalar_lea.sflag [#allocation7], 1
    %878 = vsyncpa %s877, 1
    %879 = vsyncpa [#allocation16], 1
    %s880 = scalar_lea.sflag [#allocation16], 1
    %881 = vsyncpa %s880, 1

</llo_original>
